<compile_context>
chip_gen: v5e
topology: v5e:2x2
jax: 0.10.0
libtpu: 0.0.40
codegen_flags: <defaults>
</compile_context>

<pallas_src>
import jax
import jax.numpy as jnp
from jax.experimental import pallas as pl
from jax.experimental.pallas import tpu as pltpu


# ---------------------------------------------------------------------------
# Kernel: pure pass-through of one tile.
# ---------------------------------------------------------------------------
def _copy_kernel(x_ref, o_ref):
    o_ref[...] = x_ref[...]


def _pick_tile_rows(n_rows, n_cols, dtype, target_block_bytes):
    """Largest row tile whose block stays under target_block_bytes.

    Keeps the (8, 128) tiling rule: either the tile equals the full row extent,
    or it is a multiple of the dtype's sublane-packing factor.
    """
    itemsize = jnp.dtype(dtype).itemsize
    sublane_mult = {1: 32, 2: 16}.get(itemsize, 8)
    row_bytes = max(1, n_cols * itemsize)
    tile = target_block_bytes // row_bytes
    if tile >= n_rows:
        return n_rows  # full second-to-last dim — always a legal block shape
    tile = max(sublane_mult, (tile // sublane_mult) * sublane_mult)
    return min(tile, n_rows)


def _identity_copy_2d(x2d, *, target_block_bytes=4 << 20):
    """Aliased, large-tile pass-through of a single 2-D array."""
    m, n = x2d.shape
    tile_rows = _pick_tile_rows(m, n, x2d.dtype, target_block_bytes)
    grid = (pl.cdiv(m, tile_rows),)  # partial last block handled by masking
    spec = pl.BlockSpec((tile_rows, n), lambda i: (i, 0))
    nbytes = x2d.size * jnp.dtype(x2d.dtype).itemsize

    return pl.pallas_call(
        _copy_kernel,
        out_shape=jax.ShapeDtypeStruct(x2d.shape, x2d.dtype),
        grid_spec=pltpu.PrefetchScalarGridSpec(
            num_scalar_prefetch=0,
            grid=grid,
            in_specs=[spec],
            out_specs=spec,
        ),
        # Output aliases input: when the input buffer is donated/dead, XLA can
        # skip materializing a second HBM copy entirely.
        input_output_aliases={0: 0},
        compiler_params=pltpu.CompilerParams(
            dimension_semantics=("parallel",),  # lets v7x shard blocks over 2 TCs
            vmem_limit_bytes=48 << 20,          # safe on v5e (16 MiB default) .. v7x (64 MiB phys)
        ),
        cost_estimate=pl.CostEstimate(
            flops=0, transcendentals=0, bytes_accessed=2 * nbytes
        ),
    )(x2d)


def _identity_copy(x, **kw):
    """Identity pass-through for an array of any rank via a 2-D copy kernel."""
    if x.ndim == 0:
        return x  # scalar: nothing to tile
    if x.ndim == 1:
        x2d = x.reshape(1, x.shape[0])
    else:
        x2d = x.reshape(-1, x.shape[-1])
    y2d = _identity_copy_2d(x2d, **kw)
    return y2d.reshape(x.shape)


# ---------------------------------------------------------------------------
# Module-equivalent wrappers.
# ---------------------------------------------------------------------------
def identity_loss_no_kernel(q, k):
    """The optimal IdentityLoss.forward: zero FLOPs, zero bytes — just return."""
    return (q, k)


def identity_loss(q, k):
    """IdentityLoss.forward through a Pallas boundary.

    q and k are handled by independent aliased copy calls, so they may have
    different shapes and dtypes (matching the original nn.Module's generality).
    """
    return _identity_copy(q), _identity_copy(k)


if __name__ == "__main__":
    key = jax.random.PRNGKey(0)
    kq, kk = jax.random.split(key)

    # Small, deterministic inputs; deliberately different shapes/dtypes and an
    # M that is not a multiple of 8 for k to exercise the relaxed tiling.
    q = jax.random.normal(kq, (16, 128), dtype=jnp.float32)
    k = jax.random.normal(kk, (48, 256), dtype=jnp.float32).astype(jnp.bfloat16)

    q_out, k_out = identity_loss(q, k)
    jax.block_until_ready((q_out, k_out))

    assert q_out.shape == q.shape and q_out.dtype == q.dtype
    assert k_out.shape == k.shape and k_out.dtype == k.dtype
    assert bool(jnp.array_equal(q_out, q))
    assert bool(jnp.array_equal(k_out, k))

    # The no-kernel path is trivially identical too.
    q_nk, k_nk = identity_loss_no_kernel(q, k)
    assert q_nk is q and k_nk is k

    print("KERNEL_OK")
</pallas_src>

<mosaic_0001>
module attributes {stable_mosaic.version = 11 : i64} {
  func.func @_copy_kernel(%arg0: i32, %arg1: memref<16x128xf32, #tpu.memory_space<vmem>>, %arg2: memref<16x128xf32, #tpu.memory_space<vmem>>) attributes {dimension_semantics = [#tpu.dimension_semantics<parallel>], iteration_bounds = array<i64: 1>, scalar_prefetch = 0 : i64, scratch_operands = 0 : i64, tpu.core_type = #tpu.core_type<tc>, window_params = [{transform_indices = @transform_0, window_bounds = array<i64: 16, 128>}, {transform_indices = @transform_1, window_bounds = array<i64: 16, 128>}]} {
    %c0 = arith.constant 0 : index
    %c0_0 = arith.constant 0 : index
    %0 = vector.load %arg1[%c0, %c0_0] : memref<16x128xf32, #tpu.memory_space<vmem>>, vector<16x128xf32>
    %c0_1 = arith.constant 0 : index
    %c0_2 = arith.constant 0 : index
    %1 = vector.load %arg2[%c0_1, %c0_2] : memref<16x128xf32, #tpu.memory_space<vmem>>, vector<16x128xf32>
    tpu.vector_store %arg2[%c0_1, %c0_2], %0 {strides = array<i32>} : memref<16x128xf32, #tpu.memory_space<vmem>>, vector<16x128xf32>,
    return
  }
  func.func @transform_0(%arg0: i32) -> (i32, i32) {
    %c0_i32 = arith.constant 0 : i32
    %c0_i32_0 = arith.constant 0 : i32
    return %arg0, %c0_i32 : i32, i32
  }
  func.func @transform_1(%arg0: i32) -> (i32, i32) {
    %c0_i32 = arith.constant 0 : i32
    %c0_i32_0 = arith.constant 0 : i32
    return %arg0, %c0_i32 : i32, i32
  }
}

</mosaic_0001>

<llo_original>
// kernel: tpu_custom_call.1
$region0: #{tpu_custom_call.1}
  #allocation0 [shape = 'u32[]', space=smem, size = 0x4, offset = 0x4, fixed_abs, tag = 'smem constant byte address 0x4 - core index']
  #allocation1 [shape = 'u32[72,128]{1,0:T(1,128)}', space=vmem, size = 0x9000, scoped, tag = 'internal scratch']
  %s0 = inlined_call_operand.hbm [shape: f32[16,128], index: 0, kind: input, shape index: {}, may-alias: {0,1}]
  %s1 = inlined_call_operand.hbm [shape: f32[16,128], index: 1, kind: output, shape index: {}, may-alias: {0,1}]
  %s2 = sld [smem:[#allocation0]]
  $region18: #{tpu_custom_call.1} parent=0
    _
  %s4 = ssub.s32 1, %s2
  %s5 = scalar_select 0, %s4, %s2
  $region1: #{tpu_custom_call.1} parent=0
    #allocation2 [shape = 'u8[8192]{0}', space=vmem, size = 0x2000, scoped, tag = 'input window, operand 0, single buffered']
    #allocation3 [shape = 's32[1]{0}', space=sflag, size = 0x4, scoped, tag = 'scoped memory for tpu_custom_call.1']
    #allocation4 [shape = 's32[1]{0}', space=sflag, size = 0x4, scoped, tag = 'scoped memory for tpu_custom_call.1']
    #allocation5 [shape = 'u8[8192]{0}', space=vmem, size = 0x2000, scoped, tag = 'output window, operand 0, single buffered']
    %6 = vsyncpa [#allocation3], 0
    %7 = vsyncpa [#allocation4], 0
    // Predicated region
    $region2: #{tpu_custom_call.1} parent=1 // pred_check
      _
    $region3: #{tpu_custom_call.1} parent=1 // pred_check_branch
      %9 = sbr.rel (0) target = $region5
    $region4: #{tpu_custom_call.1} parent=1 // pred_region
      %11 = vsyncadd [#allocation3], 0
      %s12 = sshll.u32 %s0, 4
      %s13 = int_to_ptr.hbm [resolvable:$true] %s12
      %s14 = sshll.u32 [#allocation2], 4
      %s15 = int_to_ptr.vmem [resolvable:$true] %s14
      %20 = dma.hbm_to_vmem [thread:$0]  %s13, 256, %s15, [#allocation3], 128, 128, 8
    $region5: #{tpu_custom_call.1} parent=1 // pred_fallthru
      _
    // Predicated region
    $region6: #{tpu_custom_call.1} parent=1 // pred_check
      _
    $region7: #{tpu_custom_call.1} parent=1 // pred_check_branch
      %22 = sbr.rel (0) target = $region9
    $region8: #{tpu_custom_call.1} parent=1 // pred_region
      %24 = dma.done [#allocation3], 256
    $region9: #{tpu_custom_call.1} parent=1 // pred_fallthru
      _
    %v25 = vld [vmem:[#allocation2] sm:$0xff]
    %v26 = vld [vmem:[#allocation2 + $0x8] sm:$0xff]
    %27 = vst [vmem:[#allocation5] sm:$0xff] %v25
    %28 = vst [vmem:[#allocation5 + $0x8] sm:$0xff] %v26
    // Predicated region
    $region10: #{tpu_custom_call.1} parent=1 // pred_check
      _
    $region11: #{tpu_custom_call.1} parent=1 // pred_check_branch
      %30 = sbr.rel (0) target = $region13
    $region12: #{tpu_custom_call.1} parent=1 // pred_region
      %32 = vsyncadd [#allocation4], 0
      %s33 = sshll.u32 [#allocation5], 4
      %s34 = int_to_ptr.vmem [resolvable:$true] %s33
      %s35 = sshll.u32 %s1, 4
      %s36 = int_to_ptr.hbm [resolvable:$true] %s35
      %41 = dma.vmem_to_hbm [thread:$0]  %s34, 256, %s36, [#allocation4], 128, 128, 8
    $region13: #{tpu_custom_call.1} parent=1 // pred_fallthru
      _
    // Predicated region
    $region14: #{tpu_custom_call.1} parent=1 // pred_check
      _
    $region15: #{tpu_custom_call.1} parent=1 // pred_check_branch
      %43 = sbr.rel (0) target = $region17
    $region16: #{tpu_custom_call.1} parent=1 // pred_region
      %45 = dma.done [#allocation4], 256
    $region17: #{tpu_custom_call.1} parent=1 // pred_fallthru
      _
    %46 = vsyncpa [#allocation3], 1
    %47 = vsyncpa [#allocation4], 1

</llo_original>
